<compile_context>
chip_gen: v7x
topology: tpu7x:2x2x1
jax: 0.10.0
libtpu: 0.0.40
codegen_flags: <defaults>
</compile_context>

<pallas_src>
import jax
import jax.numpy as jnp
from jax.experimental import pallas as pl
from jax.experimental.pallas import tpu as pltpu


def _scale_channels_kernel(x_ref, s_ref, o_ref):
    # x_ref: (tile_rows, tile_hw)  VMEM tile of the flattened feature map
    # s_ref: (tile_rows, 1)        per-(n, c) gate, broadcast over lanes
    # Multiply in the promoted dtype (matches PyTorch type promotion for
    # mixed-precision gates), then cast to the output dtype.
    o_ref[...] = (x_ref[...] * s_ref[...]).astype(o_ref.dtype)


def _round_up(a, b):
    return ((a + b - 1) // b) * b


def _round_down(a, b):
    return (a // b) * b


def _tpu_vmem_capacity_bytes():
    """Physical per-core VMEM; conservative (v7x-sized) fallback if unknown."""
    try:
        cap = getattr(pltpu.get_tpu_info(), "vmem_capacity_bytes", None)
        if cap:
            return int(cap)
    except Exception:
        pass
    return 64 * 1024 * 1024


def scale_channels(x, scale, *, target_block_bytes=None):
    """x: (N, C, H, W), scale: (N, C, 1, 1)  ->  x * scale (broadcast)."""
    N, C, H, W = x.shape
    assert scale.shape == (N, C, 1, 1), scale.shape

    rows = N * C
    hw = H * W

    out_dtype = jnp.promote_types(x.dtype, scale.dtype)
    x_item = jnp.dtype(x.dtype).itemsize
    s_item = jnp.dtype(scale.dtype).itemsize
    o_item = jnp.dtype(out_dtype).itemsize

    # Sublane packing granularity of the narrowest streamed operand:
    # 8 rows for 4-byte dtypes, 16 for bf16/f16, 32 for 1-byte dtypes.
    row_align = max(8, 32 // min(x_item, o_item))

    vmem_cap = _tpu_vmem_capacity_bytes()
    if target_block_bytes is None:
        # 128 MiB VMEM (v5e/v6e): bigger blocks, fewer ~0.35us grid steps.
        # 64 MiB VMEM (v7x): keep ~4 MiB blocks for headroom.
        target_block_bytes = (8 if vmem_cap >= 96 * 1024 * 1024 else 4) * 1024 * 1024

    x2d = x.reshape(rows, hw)
    s2d = scale.reshape(rows, 1)  # keep the gate's own dtype (promotion in-kernel)

    # ---- lane (hw) tile --------------------------------------------------
    # Tile hw only when a row_align-row slab would exceed the block budget.
    # Ragged last blocks are handled by the cdiv grid (masked stores); never
    # fall back to one giant full-extent block on huge feature maps.
    if hw > 128 and hw * row_align * x_item > target_block_bytes:
        tile_hw = max(128, _round_down(target_block_bytes // (row_align * x_item), 128))
        tile_hw = min(tile_hw, _round_up(hw, 128))
    else:
        tile_hw = hw
    if tile_hw >= hw:
        tile_hw = hw  # full extent: always a legal block shape

    # ---- row tile ----------------------------------------------------------
    # Budget counts the x block AND the lane-padded (tile_rows, 1) gate block,
    # which occupies tile_rows * 128 * s_item of VMEM (128x inflation).
    bytes_per_row = tile_hw * x_item + 128 * s_item
    max_rows = max(row_align, target_block_bytes // bytes_per_row)
    tile_rows = min(_round_down(max_rows, row_align), 4096, _round_up(rows, row_align))
    tile_rows = max(tile_rows, row_align)
    if tile_rows >= rows:
        tile_rows = rows  # full extent (legal even when rows % row_align != 0)

    grid_rows = pl.cdiv(rows, tile_rows)
    grid_hw = pl.cdiv(hw, tile_hw)

    # v7x megacore: guarantee >= 2 grid steps so both TensorCores get work
    # whenever the row axis has room to split (neutral on v5e/v6e).
    if grid_rows * grid_hw < 2 and rows > row_align:
        tile_rows = max(row_align, _round_up(pl.cdiv(rows, 2), row_align))
        if tile_rows >= rows:
            tile_rows = rows
        grid_rows = pl.cdiv(rows, tile_rows)

    grid = (grid_rows, grid_hw)

    # ---- scoped VMEM limit: what the kernel actually needs, with headroom --
    tr_pad = _round_up(tile_rows, row_align)
    thw_pad = _round_up(tile_hw, 128)
    x_block = tr_pad * thw_pad * x_item
    o_block = tr_pad * thw_pad * o_item
    s_block = tr_pad * 128 * s_item  # lane-padded gate sliver
    vmem_needed = 2 * (x_block + o_block + s_block) + (2 << 20)  # dbl-buffer + slack
    vmem_limit = int(min(max(vmem_needed, 8 << 20), vmem_cap // 2))

    out2d = pl.pallas_call(
        _scale_channels_kernel,
        out_shape=jax.ShapeDtypeStruct((rows, hw), out_dtype),
        grid_spec=pltpu.PrefetchScalarGridSpec(
            num_scalar_prefetch=0,
            grid=grid,
            in_specs=[
                pl.BlockSpec((tile_rows, tile_hw), lambda i, j: (i, j)),
                # Gate block index is constant along the inner hw axis, so its
                # DMA is elided on repeated grid steps.
                pl.BlockSpec((tile_rows, 1), lambda i, j: (i, 0)),
            ],
            out_specs=pl.BlockSpec((tile_rows, tile_hw), lambda i, j: (i, j)),
        ),
        compiler_params=pltpu.CompilerParams(
            dimension_semantics=("parallel", "parallel"),
            vmem_limit_bytes=vmem_limit,
        ),
    )(x2d, s2d)

    return out2d.reshape(N, C, H, W)


class ScaleChannelsPallas:
    """Mirror of the PyTorch module: forward(x, outputs) = x * outputs[layers[0]]."""

    def __init__(self, layers):
        self.layers = layers

    def __call__(self, x, outputs):
        layer = outputs[self.layers[0]]
        return scale_channels(x, layer)


if __name__ == "__main__":
    keys = jax.random.split(jax.random.PRNGKey(0), 6)

    # --- primary case: aligned rows, lane-dense hw (2, 4, 16, 16) f32 -------
    x1 = jax.random.normal(keys[0], (2, 4, 16, 16), dtype=jnp.float32)
    g1 = jax.nn.sigmoid(jax.random.normal(keys[1], (2, 4, 1, 1), dtype=jnp.float32))
    outputs = {3: g1}  # outputs dict keyed by layer index, Darknet-style
    module = ScaleChannelsPallas(layers=[3])
    y1 = module(x1, outputs)
    jax.block_until_ready(y1)
    ref1 = x1 * g1
    assert y1.shape == x1.shape and y1.dtype == ref1.dtype
    assert jnp.allclose(y1, ref1, atol=1e-6, rtol=1e-6)

    # --- ragged rows (N*C=6) + non-128 spatial (7x7): masked last block -----
    x2 = jax.random.normal(keys[2], (2, 3, 7, 7), dtype=jnp.float32)
    g2 = jax.nn.sigmoid(jax.random.normal(keys[3], (2, 3, 1, 1), dtype=jnp.float32))
    y2 = scale_channels(x2, g2)
    jax.block_until_ready(y2)
    assert jnp.allclose(y2, x2 * g2, atol=1e-6, rtol=1e-6)

    # --- mixed precision: bf16 features, f32 gate -> f32 (PyTorch promotion) -
    x3 = jax.random.normal(keys[4], (2, 5, 8, 8), dtype=jnp.bfloat16)
    g3 = jax.nn.sigmoid(jax.random.normal(keys[5], (2, 5, 1, 1), dtype=jnp.float32))
    y3 = scale_channels(x3, g3)
    jax.block_until_ready(y3)
    assert y3.dtype == jnp.float32
    assert jnp.allclose(y3, x3 * g3, atol=1e-5, rtol=1e-5)

    print("KERNEL_OK")
</pallas_src>

<mosaic_0001>
module attributes {stable_mosaic.version = 11 : i64} {
  func.func @_scale_channels_kernel(%arg0: i32, %arg1: i32, %arg2: memref<8x256xf32, #tpu.memory_space<vmem>>, %arg3: memref<8x1xf32, #tpu.memory_space<vmem>>, %arg4: memref<8x256xf32, #tpu.memory_space<vmem>>) attributes {dimension_semantics = [#tpu.dimension_semantics<parallel>, #tpu.dimension_semantics<parallel>], iteration_bounds = array<i64: 1, 1>, scalar_prefetch = 0 : i64, scratch_operands = 0 : i64, tpu.core_type = #tpu.core_type<tc>, window_params = [{transform_indices = @transform_0, window_bounds = array<i64: 8, 256>}, {transform_indices = @transform_1, window_bounds = array<i64: 8, 1>}, {transform_indices = @transform_2, window_bounds = array<i64: 8, 256>}]} {
    %c0 = arith.constant 0 : index
    %c0_0 = arith.constant 0 : index
    %0 = vector.load %arg2[%c0, %c0_0] : memref<8x256xf32, #tpu.memory_space<vmem>>, vector<8x256xf32>
    %c0_1 = arith.constant 0 : index
    %c0_2 = arith.constant 0 : index
    %1 = vector.load %arg3[%c0_1, %c0_2] : memref<8x1xf32, #tpu.memory_space<vmem>>, vector<8x1xf32>
    %2 = vector.broadcast %1 : vector<8x1xf32> to vector<8x256xf32>
    %3 = arith.mulf %0, %2 : vector<8x256xf32>
    %c0_3 = arith.constant 0 : index
    %c0_4 = arith.constant 0 : index
    %4 = vector.load %arg4[%c0_3, %c0_4] : memref<8x256xf32, #tpu.memory_space<vmem>>, vector<8x256xf32>
    tpu.vector_store %arg4[%c0_3, %c0_4], %3 {strides = array<i32>} : memref<8x256xf32, #tpu.memory_space<vmem>>, vector<8x256xf32>,
    return
  }
  func.func @transform_0(%arg0: i32, %arg1: i32) -> (i32, i32) {
    %c0_i32 = arith.constant 0 : i32
    return %arg0, %arg1 : i32, i32
  }
  func.func @transform_1(%arg0: i32, %arg1: i32) -> (i32, i32) {
    %c0_i32 = arith.constant 0 : i32
    %c0_i32_0 = arith.constant 0 : i32
    return %arg0, %c0_i32 : i32, i32
  }
  func.func @transform_2(%arg0: i32, %arg1: i32) -> (i32, i32) {
    %c0_i32 = arith.constant 0 : i32
    return %arg0, %arg1 : i32, i32
  }
}

</mosaic_0001>

<llo_original>
// kernel: tpu_custom_call.1
$region0: #{tpu_custom_call.1}
  #allocation0 [shape = 'u32[]', space=smem, size = 0x4, offset = 0x4, fixed_abs, tag = 'smem constant byte address 0x4 - core index']
  #allocation1 [shape = 'u32[144,128]{1,0:T(1,128)}', space=vmem, size = 0x12000, scoped, tag = 'internal scratch']
  %s0 = inlined_call_operand.hbm [shape: f32[8,256], index: 0, kind: input, shape index: {}]
  %s1 = inlined_call_operand.vmem [shape: f32[8,1], index: 1, kind: input, shape index: {}]
  %s2 = inlined_call_operand.hbm [shape: f32[8,256], index: 2, kind: output, shape index: {}]
  %s3 = sld [smem:[#allocation0]]
  $region22: #{tpu_custom_call.1} parent=0
    _
  %s5 = ssub.s32 1, %s3
  %s6 = scalar_select 0, %s5, %s3
  $region1: #{tpu_custom_call.1} parent=0
    #allocation2 [shape = 'u8[8192]{0}', space=vmem, size = 0x2000, scoped, tag = 'input window, operand 0, single buffered']
    #allocation3 [shape = 's32[1]{0}', space=sflag, size = 0x4, scoped, tag = 'scoped memory for tpu_custom_call.1']
    #allocation4 [shape = 's32[1]{0}', space=sflag, size = 0x4, scoped, tag = 'scoped memory for tpu_custom_call.1']
    #allocation5 [shape = 'u8[8192]{0}', space=vmem, size = 0x2000, scoped, tag = 'output window, operand 0, single buffered']
    %7 = vsyncpa [#allocation3], 0
    %8 = vsyncpa [#allocation4], 0
    // Predicated region
    $region2: #{tpu_custom_call.1} parent=1 // pred_check
      _
    $region3: #{tpu_custom_call.1} parent=1 // pred_check_branch
      %10 = sbr.rel (0) target = $region5
    $region4: #{tpu_custom_call.1} parent=1 // pred_region
      %s12 = ssub.s32 256, 256
      %13 = vsyncadd [#allocation3], %s12
      %s15 = sshll.u32 [#allocation2], 4
      %s16 = int_to_ptr.vmem [resolvable:$true] %s15
      %18 = dma.hbm_to_vmem [thread:$0]  %s0, 256, %s16, [#allocation3]
    $region5: #{tpu_custom_call.1} parent=1 // pred_fallthru
      _
    // Predicated region
    $region6: #{tpu_custom_call.1} parent=1 // pred_check
      _
    $region7: #{tpu_custom_call.1} parent=1 // pred_check_branch
      %20 = sbr.rel (0) target = $region9
    $region8: #{tpu_custom_call.1} parent=1 // pred_region
      _
    $region9: #{tpu_custom_call.1} parent=1 // pred_fallthru
      _
    // Predicated region
    $region10: #{tpu_custom_call.1} parent=1 // pred_check
      _
    $region11: #{tpu_custom_call.1} parent=1 // pred_check_branch
      %22 = sbr.rel (0) target = $region13
    $region12: #{tpu_custom_call.1} parent=1 // pred_region
      %23 = dma.done [#allocation3], 256
    $region13: #{tpu_custom_call.1} parent=1 // pred_fallthru
      _
    %v24 = vld [vmem:[#allocation2] sm:$0xff]
    %v25 = vld [vmem:[#allocation2 + $0x8] sm:$0xff]
    %v26 = vld [vmem:[%s1] sm:$0xff]
    %28 = vset.pattern.permute.xlu0 0
    %29 = vperm.xlu0 %28, %v26
    %v30 = vpop.permute.xlu0 %29
    %v32 = vmul.f32 %v24, %v30
    %v33 = vmul.f32 %v25, %v30
    %34 = vst [vmem:[#allocation5] sm:$0xff] %v32
    %35 = vst [vmem:[#allocation5 + $0x8] sm:$0xff] %v33
    // Predicated region
    $region14: #{tpu_custom_call.1} parent=1 // pred_check
      _
    $region15: #{tpu_custom_call.1} parent=1 // pred_check_branch
      %37 = sbr.rel (0) target = $region17
    $region16: #{tpu_custom_call.1} parent=1 // pred_region
      %s39 = ssub.s32 256, 256
      %40 = vsyncadd [#allocation4], %s39
      %s42 = sshll.u32 [#allocation5], 4
      %s43 = int_to_ptr.vmem [resolvable:$true] %s42
      %45 = dma.vmem_to_hbm [thread:$0]  %s43, 256, %s2, [#allocation4]
    $region17: #{tpu_custom_call.1} parent=1 // pred_fallthru
      _
    // Predicated region
    $region18: #{tpu_custom_call.1} parent=1 // pred_check
      _
    $region19: #{tpu_custom_call.1} parent=1 // pred_check_branch
      %47 = sbr.rel (0) target = $region21
    $region20: #{tpu_custom_call.1} parent=1 // pred_region
      %48 = dma.done [#allocation4], 256
    $region21: #{tpu_custom_call.1} parent=1 // pred_fallthru
      _
    %49 = vsyncpa [#allocation3], 1
    %50 = vsyncpa [#allocation4], 1

</llo_original>
